<compile_context>
chip_gen: v7x
topology: tpu7x:2x2x1
jax: 0.10.0
libtpu: 0.0.40
codegen_flags: <defaults>
</compile_context>

<pallas_src>
import math

import jax
import jax.numpy as jnp
from jax.experimental import pallas as pl
from jax.experimental.pallas import tpu as pltpu


def _linear_kernel(x_ref, wt_ref, b_ref, o_ref):
    # x_ref:  (TILE_B, 1)       f32
    # wt_ref: (1, OUT_pad)      f32   (weight reshaped, zero-padded to 128 lanes)
    # b_ref:  (1, OUT_pad)      f32   (bias, zero-padded)
    # o_ref:  (TILE_B, OUT_pad) f32
    #
    # Rank-1 "matmul" done on the VPU as a broadcast multiply-add.
    o_ref[...] = x_ref[...] * wt_ref[...] + b_ref[...]


def angle_encoding_linear(x, weight, bias, *, tile_b=512):
    """x: (B, 1); weight: (OUT, 1); bias: (OUT,)  ->  (B, OUT) f32."""
    B = x.shape[0]
    out_features = weight.shape[0]

    # Lane-dense output: pad OUT up to a multiple of 128.
    out_pad = pl.cdiv(out_features, 128) * 128

    # Batch tile: multiple of 8 sublanes, no larger than (padded) B.
    b_align = pl.cdiv(B, 8) * 8
    tile_b = max(8, min(tile_b, b_align))
    b_pad = pl.cdiv(B, tile_b) * tile_b

    x_f32 = x.astype(jnp.float32)
    x_p = jnp.zeros((b_pad, 1), jnp.float32).at[:B, :].set(x_f32)
    wt = (
        jnp.zeros((1, out_pad), jnp.float32)
        .at[:, :out_features]
        .set(weight.reshape(1, out_features).astype(jnp.float32))
    )
    b2 = (
        jnp.zeros((1, out_pad), jnp.float32)
        .at[:, :out_features]
        .set(bias.reshape(1, out_features).astype(jnp.float32))
    )

    grid = (b_pad // tile_b,)

    y_pad = pl.pallas_call(
        _linear_kernel,
        out_shape=jax.ShapeDtypeStruct((b_pad, out_pad), jnp.float32),
        grid=grid,
        in_specs=[
            pl.BlockSpec((tile_b, 1), lambda i: (i, 0)),
            pl.BlockSpec((1, out_pad), lambda i: (0, 0)),
            pl.BlockSpec((1, out_pad), lambda i: (0, 0)),
        ],
        out_specs=pl.BlockSpec((tile_b, out_pad), lambda i: (i, 0)),
        compiler_params=pltpu.CompilerParams(
            dimension_semantics=("parallel",)
        ),
    )(x_p, wt, b2)

    return y_pad[:B, :out_features]


if __name__ == "__main__":
    # Module config (small, deterministic).
    num_layer_PQC = 2
    num_qubits = 4
    out_features = num_layer_PQC * num_qubits * 3  # 24
    in_features = 1
    batch = 8

    key = jax.random.PRNGKey(0)
    k_x, k_w, k_b = jax.random.split(key, 3)

    # PyTorch nn.Linear default init: U(-1/sqrt(in), 1/sqrt(in)); in=1 -> U(-1, 1).
    bound = 1.0 / math.sqrt(in_features)
    weight = jax.random.uniform(
        k_w, (out_features, in_features), minval=-bound, maxval=bound, dtype=jnp.float32
    )
    bias = jax.random.uniform(
        k_b, (out_features,), minval=-bound, maxval=bound, dtype=jnp.float32
    )

    x = jax.random.normal(k_x, (batch, in_features), dtype=jnp.float32)

    y = angle_encoding_linear(x, weight, bias)
    y = jax.block_until_ready(y)

    # Reference check (plain JAX) to make sure semantics match nn.Linear.
    y_ref = x @ weight.T + bias
    assert y.shape == (batch, out_features)
    assert jnp.allclose(y, y_ref, atol=1e-5, rtol=1e-5)

    print("KERNEL_OK")
</pallas_src>

<mosaic_0001>
module attributes {stable_mosaic.version = 11 : i64} {
  func.func @_linear_kernel(%arg0: i32, %arg1: memref<8x1xf32, #tpu.memory_space<vmem>>, %arg2: memref<1x128xf32, #tpu.memory_space<vmem>>, %arg3: memref<1x128xf32, #tpu.memory_space<vmem>>, %arg4: memref<8x128xf32, #tpu.memory_space<vmem>>) attributes {dimension_semantics = [#tpu.dimension_semantics<parallel>], iteration_bounds = array<i64: 1>, scalar_prefetch = 0 : i64, scratch_operands = 0 : i64, tpu.core_type = #tpu.core_type<tc>, window_params = [{transform_indices = @transform_0, window_bounds = array<i64: 8, 1>}, {pipeline_mode = #tpu.pipeline_mode<synchronous>, transform_indices = @transform_1, window_bounds = array<i64: 1, 128>}, {pipeline_mode = #tpu.pipeline_mode<synchronous>, transform_indices = @transform_2, window_bounds = array<i64: 1, 128>}, {transform_indices = @transform_3, window_bounds = array<i64: 8, 128>}]} {
    %c0 = arith.constant 0 : index
    %c0_0 = arith.constant 0 : index
    %0 = vector.load %arg1[%c0, %c0_0] : memref<8x1xf32, #tpu.memory_space<vmem>>, vector<8x1xf32>
    %c0_1 = arith.constant 0 : index
    %c0_2 = arith.constant 0 : index
    %1 = vector.load %arg2[%c0_1, %c0_2] : memref<1x128xf32, #tpu.memory_space<vmem>>, vector<1x128xf32>
    %2 = vector.broadcast %0 : vector<8x1xf32> to vector<8x128xf32>
    %3 = vector.broadcast %1 : vector<1x128xf32> to vector<8x128xf32>
    %4 = arith.mulf %2, %3 : vector<8x128xf32>
    %c0_3 = arith.constant 0 : index
    %c0_4 = arith.constant 0 : index
    %5 = vector.load %arg3[%c0_3, %c0_4] : memref<1x128xf32, #tpu.memory_space<vmem>>, vector<1x128xf32>
    %6 = vector.broadcast %5 : vector<1x128xf32> to vector<8x128xf32>
    %7 = arith.addf %4, %6 : vector<8x128xf32>
    %c0_5 = arith.constant 0 : index
    %c0_6 = arith.constant 0 : index
    %8 = vector.load %arg4[%c0_5, %c0_6] : memref<8x128xf32, #tpu.memory_space<vmem>>, vector<8x128xf32>
    tpu.vector_store %arg4[%c0_5, %c0_6], %7 {strides = array<i32>} : memref<8x128xf32, #tpu.memory_space<vmem>>, vector<8x128xf32>,
    return
  }
  func.func @transform_0(%arg0: i32) -> (i32, i32) {
    %c0_i32 = arith.constant 0 : i32
    %c0_i32_0 = arith.constant 0 : i32
    return %arg0, %c0_i32 : i32, i32
  }
  func.func @transform_1(%arg0: i32) -> (i32, i32) {
    %c0_i32 = arith.constant 0 : i32
    %c0_i32_0 = arith.constant 0 : i32
    %c0_i32_1 = arith.constant 0 : i32
    return %c0_i32, %c0_i32_0 : i32, i32
  }
  func.func @transform_2(%arg0: i32) -> (i32, i32) {
    %c0_i32 = arith.constant 0 : i32
    %c0_i32_0 = arith.constant 0 : i32
    %c0_i32_1 = arith.constant 0 : i32
    return %c0_i32, %c0_i32_0 : i32, i32
  }
  func.func @transform_3(%arg0: i32) -> (i32, i32) {
    %c0_i32 = arith.constant 0 : i32
    %c0_i32_0 = arith.constant 0 : i32
    return %arg0, %c0_i32 : i32, i32
  }
}

</mosaic_0001>

<llo_original>
// kernel: tpu_custom_call.1
$region0: #{tpu_custom_call.1}
  #allocation0 [shape = 'u32[]', space=smem, size = 0x4, offset = 0x4, fixed_abs, tag = 'smem constant byte address 0x4 - core index']
  #allocation1 [shape = 'u32[144,128]{1,0:T(1,128)}', space=vmem, size = 0x12000, scoped, tag = 'internal scratch']
  %s0 = inlined_call_operand.vmem [shape: f32[8,1], index: 0, kind: input, shape index: {}]
  %s1 = inlined_call_operand.vmem [shape: f32[1,128], index: 1, kind: input, shape index: {}]
  %s2 = inlined_call_operand.vmem [shape: f32[1,128], index: 2, kind: input, shape index: {}]
  %s3 = inlined_call_operand.hbm [shape: f32[8,128], index: 3, kind: output, shape index: {}]
  %s4 = sld [smem:[#allocation0]]
  $region22: #{tpu_custom_call.1} parent=0
    _
  %s6 = ssub.s32 1, %s4
  %s7 = scalar_select 0, %s6, %s4
  $region1: #{tpu_custom_call.1} parent=0
    #allocation2 [shape = 'u8[4096]{0}', space=vmem, size = 0x1000, scoped, tag = 'output window, operand 0, single buffered']
    #allocation3 [shape = 's32[1]{0}', space=sflag, size = 0x4, scoped, tag = 'scoped memory for tpu_custom_call.1']
    %8 = vsyncpa [#allocation3], 0
    // Predicated region
    $region2: #{tpu_custom_call.1} parent=1 // pred_check
      _
    $region3: #{tpu_custom_call.1} parent=1 // pred_check_branch
      %10 = sbr.rel (0) target = $region5
    $region4: #{tpu_custom_call.1} parent=1 // pred_region
      _
    $region5: #{tpu_custom_call.1} parent=1 // pred_fallthru
      _
    // Predicated region
    $region6: #{tpu_custom_call.1} parent=1 // pred_check
      _
    $region7: #{tpu_custom_call.1} parent=1 // pred_check_branch
      %12 = sbr.rel (0) target = $region9
    $region8: #{tpu_custom_call.1} parent=1 // pred_region
      _
    $region9: #{tpu_custom_call.1} parent=1 // pred_fallthru
      _
    // Predicated region
    $region10: #{tpu_custom_call.1} parent=1 // pred_check
      _
    $region11: #{tpu_custom_call.1} parent=1 // pred_check_branch
      %14 = sbr.rel (0) target = $region13
    $region12: #{tpu_custom_call.1} parent=1 // pred_region
      _
    $region13: #{tpu_custom_call.1} parent=1 // pred_fallthru
      _
    %v15 = vld [vmem:[%s0] sm:$0xff]
    %v16 = vld [vmem:[%s1] sm:$0x1]
    %18 = vset.pattern.permute.xlu0 0
    %19 = vperm.xlu0 %18, %v15
    %v20 = vpop.permute.xlu0 %19
    %v23 = vlaneseq
    %v24 = vshrl.u32 %v23, 7
    %v25 = vsub.s32 0, %v24
    %v26 = vrot.slane %v16, %v25
    %v28 = vmul.f32 %v20, %v26
    %v29 = vld [vmem:[%s2] sm:$0x1]
    %v31 = vlaneseq
    %v32 = vshrl.u32 %v31, 7
    %v33 = vsub.s32 0, %v32
    %v34 = vrot.slane %v29, %v33
    %v36 = vadd.f32 %v28, %v34
    %37 = vst [vmem:[#allocation2] sm:$0xff] %v36
    // Predicated region
    $region14: #{tpu_custom_call.1} parent=1 // pred_check
      _
    $region15: #{tpu_custom_call.1} parent=1 // pred_check_branch
      %39 = sbr.rel (0) target = $region17
    $region16: #{tpu_custom_call.1} parent=1 // pred_region
      %s41 = ssub.s32 128, 128
      %42 = vsyncadd [#allocation3], %s41
      %s44 = sshll.u32 [#allocation2], 4
      %s45 = int_to_ptr.vmem [resolvable:$true] %s44
      %47 = dma.vmem_to_hbm [thread:$0]  %s45, 128, %s3, [#allocation3]
    $region17: #{tpu_custom_call.1} parent=1 // pred_fallthru
      _
    // Predicated region
    $region18: #{tpu_custom_call.1} parent=1 // pred_check
      _
    $region19: #{tpu_custom_call.1} parent=1 // pred_check_branch
      %49 = sbr.rel (0) target = $region21
    $region20: #{tpu_custom_call.1} parent=1 // pred_region
      %50 = dma.done [#allocation3], 128
    $region21: #{tpu_custom_call.1} parent=1 // pred_fallthru
      _
    %51 = vsyncpa [#allocation3], 1

</llo_original>
